<compile_context>
chip_gen: v5e
topology: v5e:2x2
jax: 0.10.0
libtpu: 0.0.40
codegen_flags: <defaults>
</compile_context>

<pallas_src>
import math

import numpy as np
import jax
import jax.numpy as jnp
from jax import lax
from jax.experimental import pallas as pl
from jax.experimental.pallas import tpu as pltpu

# ---- config (small, consistent with the module) -----------------------------
B = 2            # batch
T = 8            # sequence length (block_size)
C = 32           # n_embd
N_HEAD = 4       # n_head
HEAD_DIM = C // N_HEAD
LANE = 128       # vreg lane width; q/k/v blocks of the fused QKV output align to it


def _attn_kernel(x_ref, wqkv_ref, wp_ref, bp_ref, hm_ref, bias_ref, o_ref):
    """Single-invocation causal self-attention.

    x_ref   : (B*T, C+1)        bf16  activations + constant-1 lane (folds QKV bias)
    wqkv_ref: (C+1, 3*LANE)     bf16  [q|k|v] blocks, each 128-lane aligned;
                                      q block pre-scaled by 1/sqrt(head_dim); last row = bias
    wp_ref  : (LANE, C)         bf16  output projection, rows >= C are zero padding
    bp_ref  : (1, C)            f32   output projection bias
    hm_ref  : (N_HEAD*B*T, LANE) bf16 constant head lane mask (padding lanes = 1)
    bias_ref: (B*T, N_HEAD*B*T) f32   constant block-diag causal additive mask (0 / -1e30)
    o_ref   : (B*T, C)          f32
    """
    n_rows = x_ref.shape[0]
    n_head = hm_ref.shape[0] // n_rows

    # 1) Fused QKV projection: one bf16 MXU dot, f32 accumulate.
    qkv = jnp.dot(x_ref[...], wqkv_ref[...], preferred_element_type=jnp.float32)
    q = qkv[:, 0 * LANE:1 * LANE]        # vreg-aligned slices (lanes 0:32 hold data)
    k = qkv[:, 1 * LANE:2 * LANE]
    v = qkv[:, 2 * LANE:3 * LANE]

    # 2) Row-replicate K/V once per head and mask each replica to its head's
    #    lanes (constant mask) so everything downstream is a plain 2-D dot.
    hm = hm_ref[...]                                   # (n_head*B*T, 128) bf16 {0,1}
    hm_f32 = hm.astype(jnp.float32)
    k_all = (jnp.concatenate([k] * n_head, axis=0) * hm_f32).astype(jnp.bfloat16)
    v_all = (jnp.concatenate([v] * n_head, axis=0) * hm_f32).astype(jnp.bfloat16)

    # 3) All heads' scores in ONE dot: column block h = q_h @ k_h^T (the MXU
    #    absorbs the K transpose via the contracting dims).
    s = lax.dot_general(q.astype(jnp.bfloat16), k_all, (((1,), (1,)), ((), ())),
                        preferred_element_type=jnp.float32)     # (B*T, n_head*B*T)
    s = s + bias_ref[...]                 # block-diagonal causal mask, finite fill

    # 4) Softmax, shifted by the global row max (exact per head by shift
    #    invariance; masked entries underflow to exactly 0).
    mx = jnp.max(s, axis=-1, keepdims=True)
    e = jnp.exp(s - mx)
    eb = e.astype(jnp.bfloat16)

    # 5) Unnormalized PV and per-head denominators as two independent dots; the
    #    constant lane mask broadcasts each head's denominator onto that head's
    #    output lanes (padding lanes get the total sum, so never 0/0).
    y_un = jnp.dot(eb, v_all, preferred_element_type=jnp.float32)   # (B*T, 128)
    den = jnp.dot(eb, hm, preferred_element_type=jnp.float32)       # (B*T, 128)
    y = (y_un / den).astype(jnp.bfloat16)      # exact divide, no approx reciprocal

    # 6) Output projection + bias, stored as a plain (B*T, C) tile.
    out = jnp.dot(y, wp_ref[...], preferred_element_type=jnp.float32) + bp_ref[...]
    o_ref[...] = out.astype(o_ref.dtype)


def _build_constants(b, t, n_head, head_dim, lane=LANE):
    """Compile-time constants (numpy): additive causal mask and head lane mask."""
    n = b * t
    c = n_head * head_dim
    r = np.arange(n)
    allow = ((r[:, None] // t) == (r[None, :] // t)) & ((r[:, None] % t) >= (r[None, :] % t))
    bias = np.where(allow, 0.0, -1e30).astype(np.float32)        # (n, n), finite fill
    bias = np.tile(bias, (1, n_head))                            # (n, n_head*n)

    rows = np.arange(n_head * n)[:, None]      # replica row -> head = row // n
    lanes = np.arange(lane)[None, :]           # lane -> head = lane // head_dim (lanes < c)
    same_head = (lanes // head_dim) == (rows // n)
    hm = np.where(lanes < c, same_head, True).astype(np.float32)  # padding lanes = 1
    return jnp.asarray(bias), jnp.asarray(hm, dtype=jnp.bfloat16)


def _pack_params(wq, wk, wv, wp, bq, bk, bv, scale):
    """One-time parameter packing (done offline in real use): fused, lane-aligned,
    bias-folded, pre-scaled bf16 QKV weight + zero-row-padded output projection."""
    c = wq.shape[0]
    wqkv = jnp.zeros((c + 1, 3 * LANE), jnp.float32)
    wqkv = wqkv.at[:c, 0:c].set(wq * scale)                 # q block (pre-scaled)
    wqkv = wqkv.at[c, 0:c].set(bq[0] * scale)
    wqkv = wqkv.at[:c, LANE:LANE + c].set(wk)               # k block
    wqkv = wqkv.at[c, LANE:LANE + c].set(bk[0])
    wqkv = wqkv.at[:c, 2 * LANE:2 * LANE + c].set(wv)       # v block
    wqkv = wqkv.at[c, 2 * LANE:2 * LANE + c].set(bv[0])
    wp_pad = jnp.zeros((LANE, c), jnp.float32).at[:c, :].set(wp)
    return wqkv.astype(jnp.bfloat16), wp_pad.astype(jnp.bfloat16)


def causal_self_attention(x, wq, wk, wv, wp, bq, bk, bv, bp):
    """x: (B, T, C) f32; weights (C_in, C_out); biases (1, C). Dropout = identity."""
    b, t, c = x.shape
    head_dim = c // N_HEAD
    n = b * t

    wqkv, wp_pad = _pack_params(wq, wk, wv, wp, bq, bk, bv, 1.0 / math.sqrt(head_dim))
    bias_c, hm_c = _build_constants(b, t, N_HEAD, head_dim)

    # Activation prep in XLA: metadata reshape + constant-1 lane (folds the QKV
    # bias into the weight) + bf16 cast for the MXU.
    x1 = jnp.concatenate([x.reshape(n, c), jnp.ones((n, 1), x.dtype)], axis=1)
    x1 = x1.astype(jnp.bfloat16)

    vmem = pl.BlockSpec(memory_space=pltpu.MemorySpace.VMEM)
    out = pl.pallas_call(
        _attn_kernel,
        out_shape=jax.ShapeDtypeStruct((n, c), jnp.float32),
        in_specs=[vmem] * 6,
        out_specs=vmem,
    )(x1, wqkv, wp_pad, bp, hm_c, bias_c)

    return out.reshape(b, t, c)            # metadata-only reshape, no slice needed


def _reference(x, wq, wk, wv, wp, bq, bk, bv, bp):
    # Pure-JAX f32 reference mirroring the PyTorch forward (dropout = identity).
    bx, tx, cx = x.shape
    d = cx // N_HEAD

    def heads(a):
        return a.reshape(bx, tx, N_HEAD, d).transpose(0, 2, 1, 3)

    q, k, v = heads(x @ wq + bq), heads(x @ wk + bk), heads(x @ wv + bv)
    att = jnp.einsum("bhtd,bhsd->bhts", q, k) / math.sqrt(d)
    mask = jnp.tril(jnp.ones((tx, tx), bool))
    att = jnp.where(mask[None, None], att, -jnp.inf)
    att = jax.nn.softmax(att, axis=-1)
    y = jnp.einsum("bhts,bhsd->bhtd", att, v)
    y = y.transpose(0, 2, 1, 3).reshape(bx, tx, cx)
    return y @ wp + bp


if __name__ == "__main__":
    key = jax.random.PRNGKey(0)
    ks = jax.random.split(key, 9)
    lim = 1.0 / math.sqrt(C)  # ~ PyTorch nn.Linear default init scale

    x = jax.random.normal(ks[0], (B, T, C), jnp.float32)
    wq = jax.random.uniform(ks[1], (C, C), jnp.float32, -lim, lim)
    wk = jax.random.uniform(ks[2], (C, C), jnp.float32, -lim, lim)
    wv = jax.random.uniform(ks[3], (C, C), jnp.float32, -lim, lim)
    wp = jax.random.uniform(ks[4], (C, C), jnp.float32, -lim, lim)
    bq = jax.random.uniform(ks[5], (1, C), jnp.float32, -lim, lim)
    bk = jax.random.uniform(ks[6], (1, C), jnp.float32, -lim, lim)
    bv = jax.random.uniform(ks[7], (1, C), jnp.float32, -lim, lim)
    bp = jax.random.uniform(ks[8], (1, C), jnp.float32, -lim, lim)

    out = jax.jit(causal_self_attention)(x, wq, wk, wv, wp, bq, bk, bv, bp)
    out = jax.block_until_ready(out)

    ref = _reference(x, wq, wk, wv, wp, bq, bk, bv, bp)
    # Tolerance reflects bf16 MXU operands (f32 accumulation and f32 softmax math);
    # the softmax divide itself is exact.
    assert jnp.allclose(out, ref, atol=3e-2, rtol=3e-2), "mismatch vs reference"

    print("KERNEL_OK")
</pallas_src>

<mosaic_0001>
module attributes {stable_mosaic.version = 11 : i64} {
  func.func @_attn_kernel(%arg0: memref<16x33xbf16, #tpu.memory_space<vmem>>, %arg1: memref<33x384xbf16, #tpu.memory_space<vmem>>, %arg2: memref<128x32xbf16, #tpu.memory_space<vmem>>, %arg3: memref<1x32xf32, #tpu.memory_space<vmem>>, %arg4: memref<64x128xbf16, #tpu.memory_space<vmem>>, %arg5: memref<16x64xf32, #tpu.memory_space<vmem>>, %arg6: memref<16x32xf32, #tpu.memory_space<vmem>>) attributes {dimension_semantics = [], scalar_prefetch = 0 : i64, scratch_operands = 0 : i64, tpu.core_type = #tpu.core_type<tc>} {
    %c0 = arith.constant 0 : index
    %c0_0 = arith.constant 0 : index
    %0 = vector.load %arg0[%c0, %c0_0] : memref<16x33xbf16, #tpu.memory_space<vmem>>, vector<16x33xbf16>
    %c0_1 = arith.constant 0 : index
    %c0_2 = arith.constant 0 : index
    %1 = vector.load %arg1[%c0_1, %c0_2] : memref<33x384xbf16, #tpu.memory_space<vmem>>, vector<33x384xbf16>
    %cst = arith.constant dense<0.000000e+00> : vector<16x384xf32>
    %2 = tpu.matmul %0, %1, %cst {dimension_numbers = #tpu.dot_dimension_numbers<[1], [0], [0], [1], [0, 0, 1, 1], [], []>} : vector<16x33xbf16>, vector<33x384xbf16>, vector<16x384xf32> -> vector<16x384xf32>
    %3 = vector.extract_strided_slice %2 {offsets = [0, 0], sizes = [16, 128], strides = [1, 1]} : vector<16x384xf32> to vector<16x128xf32>
    %4 = vector.extract_strided_slice %2 {offsets = [0, 128], sizes = [16, 128], strides = [1, 1]} : vector<16x384xf32> to vector<16x128xf32>
    %5 = vector.extract_strided_slice %2 {offsets = [0, 256], sizes = [16, 128], strides = [1, 1]} : vector<16x384xf32> to vector<16x128xf32>
    %c0_3 = arith.constant 0 : index
    %c0_4 = arith.constant 0 : index
    %6 = vector.load %arg4[%c0_3, %c0_4] : memref<64x128xbf16, #tpu.memory_space<vmem>>, vector<64x128xbf16>
    %7 = arith.extf %6 : vector<64x128xbf16> to vector<64x128xf32>
    %8 = tpu.concatenate %4, %4, %4, %4 in 0 : vector<16x128xf32>, vector<16x128xf32>, vector<16x128xf32>, vector<16x128xf32> -> vector<64x128xf32>
    %9 = arith.mulf %8, %7 : vector<64x128xf32>
    %10 = arith.truncf %9 : vector<64x128xf32> to vector<64x128xbf16>
    %11 = tpu.concatenate %5, %5, %5, %5 in 0 : vector<16x128xf32>, vector<16x128xf32>, vector<16x128xf32>, vector<16x128xf32> -> vector<64x128xf32>
    %12 = arith.mulf %11, %7 : vector<64x128xf32>
    %13 = arith.truncf %12 : vector<64x128xf32> to vector<64x128xbf16>
    %14 = arith.truncf %3 : vector<16x128xf32> to vector<16x128xbf16>
    %cst_5 = arith.constant dense<0.000000e+00> : vector<16x64xf32>
    %15 = tpu.matmul %14, %10, %cst_5 {dimension_numbers = #tpu.dot_dimension_numbers<[1], [1], [0], [0], [0, 0, 1, 0], [], []>} : vector<16x128xbf16>, vector<64x128xbf16>, vector<16x64xf32> -> vector<16x64xf32>
    %c0_6 = arith.constant 0 : index
    %c0_7 = arith.constant 0 : index
    %16 = vector.load %arg5[%c0_6, %c0_7] : memref<16x64xf32, #tpu.memory_space<vmem>>, vector<16x64xf32>
    %17 = arith.addf %15, %16 : vector<16x64xf32>
    %cst_8 = arith.constant dense<0xFF800000> : vector<16xf32>
    %18 = vector.multi_reduction <maximumf>, %17, %cst_8 [1] : vector<16x64xf32> to vector<16xf32>
    %19 = vector.shape_cast %18 : vector<16xf32> to vector<16x1xf32>
    %20 = vector.broadcast %19 : vector<16x1xf32> to vector<16x64xf32>
    %21 = arith.subf %17, %20 : vector<16x64xf32>
    %22 = math.exp %21 : vector<16x64xf32>
    %23 = arith.truncf %22 : vector<16x64xf32> to vector<16x64xbf16>
    %cst_9 = arith.constant dense<0.000000e+00> : vector<16x128xf32>
    %24 = tpu.matmul %23, %13, %cst_9 {dimension_numbers = #tpu.dot_dimension_numbers<[1], [0], [0], [1], [0, 0, 1, 1], [], []>} : vector<16x64xbf16>, vector<64x128xbf16>, vector<16x128xf32> -> vector<16x128xf32>
    %cst_10 = arith.constant dense<0.000000e+00> : vector<16x128xf32>
    %25 = tpu.matmul %23, %6, %cst_10 {dimension_numbers = #tpu.dot_dimension_numbers<[1], [0], [0], [1], [0, 0, 1, 1], [], []>} : vector<16x64xbf16>, vector<64x128xbf16>, vector<16x128xf32> -> vector<16x128xf32>
    %26 = arith.divf %24, %25 : vector<16x128xf32>
    %27 = arith.truncf %26 : vector<16x128xf32> to vector<16x128xbf16>
    %c0_11 = arith.constant 0 : index
    %c0_12 = arith.constant 0 : index
    %28 = vector.load %arg2[%c0_11, %c0_12] : memref<128x32xbf16, #tpu.memory_space<vmem>>, vector<128x32xbf16>
    %cst_13 = arith.constant dense<0.000000e+00> : vector<16x32xf32>
    %29 = tpu.matmul %27, %28, %cst_13 {dimension_numbers = #tpu.dot_dimension_numbers<[1], [0], [0], [1], [0, 0, 1, 1], [], []>} : vector<16x128xbf16>, vector<128x32xbf16>, vector<16x32xf32> -> vector<16x32xf32>
    %c0_14 = arith.constant 0 : index
    %c0_15 = arith.constant 0 : index
    %30 = vector.load %arg3[%c0_14, %c0_15] : memref<1x32xf32, #tpu.memory_space<vmem>>, vector<1x32xf32>
    %31 = vector.broadcast %30 : vector<1x32xf32> to vector<16x32xf32>
    %32 = arith.addf %29, %31 : vector<16x32xf32>
    %c0_16 = arith.constant 0 : index
    %c0_17 = arith.constant 0 : index
    %33 = vector.load %arg6[%c0_16, %c0_17] : memref<16x32xf32, #tpu.memory_space<vmem>>, vector<16x32xf32>
    tpu.vector_store %arg6[%c0_16, %c0_17], %32 {strides = array<i32>} : memref<16x32xf32, #tpu.memory_space<vmem>>, vector<16x32xf32>,
    return
  }
}

</mosaic_0001>

<llo_original>
// kernel: causal_self_attention.1
$region0: #{causal_self_attention.1}
  #allocation0 [shape = 'u32[]', space=smem, size = 0x4, offset = 0x4, fixed_abs, tag = 'smem constant byte address 0x4 - core index']
  #allocation1 [shape = 'u32[72,128]{1,0:T(1,128)}', space=vmem, size = 0x9000, scoped, tag = 'internal scratch']
  %s0 = inlined_call_operand.vmem [shape: bf16[16,33], index: 0, kind: input, shape index: {}]
  %s1 = inlined_call_operand.vmem [shape: bf16[33,384], index: 1, kind: input, shape index: {}]
  %s2 = inlined_call_operand.vmem [shape: bf16[128,32], index: 2, kind: input, shape index: {}]
  %s3 = inlined_call_operand.vmem [shape: f32[1,32], index: 3, kind: input, shape index: {}]
  %s4 = inlined_call_operand.vmem [shape: bf16[64,128], index: 4, kind: input, shape index: {}]
  %s5 = inlined_call_operand.vmem [shape: f32[16,64], index: 5, kind: input, shape index: {}]
  %s6 = inlined_call_operand.hbm [shape: f32[16,32], index: 6, kind: output, shape index: {}]
  %s7 = sld [smem:[#allocation0]]
  $region34: #{causal_self_attention.1} parent=0
    _
  %s9 = ssub.s32 1, %s7
  %s10 = scalar_select 0, %s9, %s7
  $region1: #{causal_self_attention.1} parent=0
    #allocation2 [shape = 'u8[8192]{0}', space=vmem, size = 0x2000, scoped, tag = 'output window, operand 0, single buffered']
    #allocation3 [shape = 's32[1]{0}', space=sflag, size = 0x4, scoped, tag = 'scoped memory for causal_self_attention.1']
    %11 = vsyncpa [#allocation3], 0
    // Predicated region
    $region2: #{causal_self_attention.1} parent=1 // pred_check
      _
    $region3: #{causal_self_attention.1} parent=1 // pred_check_branch
      %13 = sbr.rel (0) target = $region5
    $region4: #{causal_self_attention.1} parent=1 // pred_region
      _
    $region5: #{causal_self_attention.1} parent=1 // pred_fallthru
      _
    // Predicated region
    $region6: #{causal_self_attention.1} parent=1 // pred_check
      _
    $region7: #{causal_self_attention.1} parent=1 // pred_check_branch
      %15 = sbr.rel (0) target = $region9
    $region8: #{causal_self_attention.1} parent=1 // pred_region
      _
    $region9: #{causal_self_attention.1} parent=1 // pred_fallthru
      _
    // Predicated region
    $region10: #{causal_self_attention.1} parent=1 // pred_check
      _
    $region11: #{causal_self_attention.1} parent=1 // pred_check_branch
      %17 = sbr.rel (0) target = $region13
    $region12: #{causal_self_attention.1} parent=1 // pred_region
      _
    $region13: #{causal_self_attention.1} parent=1 // pred_fallthru
      _
    // Predicated region
    $region14: #{causal_self_attention.1} parent=1 // pred_check
      _
    $region15: #{causal_self_attention.1} parent=1 // pred_check_branch
      %19 = sbr.rel (0) target = $region17
    $region16: #{causal_self_attention.1} parent=1 // pred_region
      _
    $region17: #{causal_self_attention.1} parent=1 // pred_fallthru
      _
    // Predicated region
    $region18: #{causal_self_attention.1} parent=1 // pred_check
      _
    $region19: #{causal_self_attention.1} parent=1 // pred_check_branch
      %21 = sbr.rel (0) target = $region21
    $region20: #{causal_self_attention.1} parent=1 // pred_region
      _
    $region21: #{causal_self_attention.1} parent=1 // pred_fallthru
      _
    // Predicated region
    $region22: #{causal_self_attention.1} parent=1 // pred_check
      _
    $region23: #{causal_self_attention.1} parent=1 // pred_check_branch
      %23 = sbr.rel (0) target = $region25
    $region24: #{causal_self_attention.1} parent=1 // pred_region
      _
    $region25: #{causal_self_attention.1} parent=1 // pred_fallthru
      _
    %v25 = vld [vmem:[%s0] sm:$0xf]
    %v26 = vld [vmem:[%s0 + $0x4] sm:$0xf]
    %v27 = vld [vmem:[%s1] sm:$0xff]
    %v28 = vld [vmem:[%s1 + $0x8] sm:$0xf]
    %v29 = vld [vmem:[%s1 + $0xc] sm:$0xff]
    %v30 = vld [vmem:[%s1 + $0x14] sm:$0xf]
    %v31 = vld [vmem:[%s1 + $0x18] sm:$0xff]
    %v32 = vld [vmem:[%s1 + $0x20] sm:$0xf]
    %v33 = vld [vmem:[%s1 + $0x24] sm:$0xff]
    %v34 = vld [vmem:[%s1 + $0x2c] sm:$0xf]
    %v35 = vld [vmem:[%s1 + $0x30] sm:$0x11]
    %v36 = vld [vmem:[%s1 + $0x38] sm:$0x1]
    %v39 = vunpack.c.l.b16 %v25
    %v40 = vunpack.c.l.b16 %v26
    %v41 = vpack.c.b16 %v40, %v39
    %v52 = vunpack.c.l.b16 %v27
    %v53 = vunpack.c.h.b16 %v27
    %v54 = vunpack.c.l.b16 %v28
    %v55 = vunpack.c.l.b16 %v29
    %v56 = vunpack.c.h.b16 %v29
    %v57 = vunpack.c.l.b16 %v30
    %v58 = vunpack.c.l.b16 %v31
    %v59 = vunpack.c.h.b16 %v31
    %v60 = vunpack.c.l.b16 %v32
    %v61 = vunpack.c.l.b16 %v33
    %v62 = vunpack.c.h.b16 %v33
    %v63 = vunpack.c.l.b16 %v34
    %v64 = vunpack.c.l.b16 %v35
    %v65 = vunpack.c.h.b16 %v35
    %v66 = vunpack.c.l.b16 %v36
    %v67 = vpack.c.b16 %v55, %v52
    %v68 = vpack.c.b16 %v56, %v53
    %v69 = vpack.c.b16 %v57, %v54
    %v70 = vpack.c.b16 %v61, %v58
    %v71 = vpack.c.b16 %v62, %v59
    %v72 = vpack.c.b16 %v63, %v60
    %v73 = vpack.c.b16 %v64, %v64
    %v74 = vpack.c.b16 %v65, %v65
    %v75 = vpack.c.b16 %v66, %v66
    %vm82 = vcmask 269312
    %v84 = vsel %vm82, %v41, 0
    %vm86 = vcmask 1040384
    %v87 = vsel 0, 4294967295, 65535
    %v88 = vsel %vm86, %v87, 0
    %v90 = vand.u32 %v73, %v88
    %v93 = vand.u32 %v74, %v88
    %v96 = vand.u32 %v75, %v88
    %98 = vmatpush.bf16.msra.mxu0 0
    %99 = vmatpush.bf16.msra.mxu0 0
    %100 = vmatpush.bf16.msra.mxu0 0
    %101 = vmatpush.bf16.msra.mxu0 0
    %102 = vmatpush.bf16.msra.mxu0 0
    %103 = vmatpush.bf16.msra.mxu0 %v90
    %104 = vmatpush.bf16.msra.mxu0 %v70
    %105 = vmatpush.bf16.msra.mxu0 %v67
    %106 = vmatmul.bf16.gmra.mxu0 %v84
    %v107 = vpop.f32.mrf.mxu0
    %v108 = vadd.f32 0.0, %v107
    %v109 = vpop.f32.mrf.mxu0
    %v110 = vadd.f32 0.0, %v109
    %111 = vdwg.mxu0
    %112 = vmatpush.bf16.msra.mxu0 0
    %113 = vmatpush.bf16.msra.mxu0 0
    %114 = vmatpush.bf16.msra.mxu0 0
    %115 = vmatpush.bf16.msra.mxu0 0
    %116 = vmatpush.bf16.msra.mxu0 0
    %117 = vmatpush.bf16.msra.mxu0 %v93
    %118 = vmatpush.bf16.msra.mxu0 %v71
    %119 = vmatpush.bf16.msra.mxu0 %v68
    %120 = vmatmul.bf16.gmra.mxu0 %v84
    %v121 = vpop.f32.mrf.mxu0
    %v122 = vadd.f32 0.0, %v121
    %v123 = vpop.f32.mrf.mxu0
    %v124 = vadd.f32 0.0, %v123
    %125 = vdwg.mxu0
    %126 = vmatpush.bf16.msra.mxu0 0
    %127 = vmatpush.bf16.msra.mxu0 0
    %128 = vmatpush.bf16.msra.mxu0 0
    %129 = vmatpush.bf16.msra.mxu0 0
    %130 = vmatpush.bf16.msra.mxu0 0
    %131 = vmatpush.bf16.msra.mxu0 %v96
    %132 = vmatpush.bf16.msra.mxu0 %v72
    %133 = vmatpush.bf16.msra.mxu0 %v69
    %134 = vmatmul.bf16.gmra.mxu0 %v84
    %v135 = vpop.f32.mrf.mxu0
    %v136 = vadd.f32 0.0, %v135
    %v137 = vpop.f32.mrf.mxu0
    %v138 = vadd.f32 0.0, %v137
    %139 = vdwg.mxu0
    %v140 = vld [vmem:[%s4] sm:$0xf]
    %v141 = vld [vmem:[%s4 + $0x4] sm:$0xf]
    %v142 = vld [vmem:[%s4 + $0x8] sm:$0xf]
    %v143 = vld [vmem:[%s4 + $0xc] sm:$0xf]
    %v144 = vld [vmem:[%s4 + $0x10] sm:$0xf]
    %v145 = vld [vmem:[%s4 + $0x14] sm:$0xf]
    %v146 = vld [vmem:[%s4 + $0x18] sm:$0xf]
    %v147 = vld [vmem:[%s4 + $0x1c] sm:$0xf]
    %v148 = vunpack.c.l.bf16 %v140
    %v149 = vunpack.c.l.bf16 %v141
    %v150 = vunpack.c.l.bf16 %v142
    %v151 = vunpack.c.l.bf16 %v143
    %v152 = vunpack.c.l.bf16 %v144
    %v153 = vunpack.c.l.bf16 %v145
    %v154 = vunpack.c.l.bf16 %v146
    %v155 = vunpack.c.l.bf16 %v147
    %v156 = vmul.f32 %v122, %v148
    %v157 = vmul.f32 %v124, %v149
    %v158 = vmul.f32 %v122, %v150
    %v159 = vmul.f32 %v124, %v151
    %v160 = vmul.f32 %v122, %v152
    %v161 = vmul.f32 %v124, %v153
    %v162 = vmul.f32 %v122, %v154
    %v163 = vmul.f32 %v124, %v155
    %v164 = vpack.c.bf16 %v157, %v156
    %v165 = vpack.c.bf16 %v159, %v158
    %v166 = vpack.c.bf16 %v161, %v160
    %v167 = vpack.c.bf16 %v163, %v162
    %v168 = vmul.f32 %v136, %v148
    %v169 = vmul.f32 %v138, %v149
    %v170 = vmul.f32 %v136, %v150
    %v171 = vmul.f32 %v138, %v151
    %v172 = vmul.f32 %v136, %v152
    %v173 = vmul.f32 %v138, %v153
    %v174 = vmul.f32 %v136, %v154
    %v175 = vmul.f32 %v138, %v155
    %v176 = vpack.c.bf16 %v169, %v168
    %v177 = vpack.c.bf16 %v171, %v170
    %v178 = vpack.c.bf16 %v173, %v172
    %v179 = vpack.c.bf16 %v175, %v174
    %v180 = vpack.c.bf16 %v110, %v108
    %v181 = vld [vmem:[%s5] sm:$0xff]
    %v182 = vld [vmem:[%s5 + $0x8] sm:$0xff]
    %183 = vmatpush.bf16.xpose.msra.mxu0 0
    %184 = vmatpush.bf16.xpose.msra.mxu0 0
    %185 = vmatpush.bf16.xpose.msra.mxu0 0
    %186 = vmatpush.bf16.xpose.msra.mxu0 0
    %187 = vmatpush.bf16.xpose.msra.mxu0 %v167
    %188 = vmatpush.bf16.xpose.msra.mxu0 %v166
    %189 = vmatpush.bf16.xpose.msra.mxu0 %v165
    %190 = vmatpush.bf16.xpose.msra.mxu0 %v164
    %191 = vmatmul.bf16.gmra.mxu0 %v180
    %v192 = vpop.f32.mrf.mxu0
    %v193 = vadd.f32 %v181, %v192
    %v194 = vpop.f32.mrf.mxu0
    %v195 = vadd.f32 %v182, %v194
    %196 = vdwg.mxu0
    %vm197 = vcmask 523264
    %v198 = vsel %vm197, %v193, -inf
    %199 = vmax.xlane.f32.xlu0 %v198
    %v200 = vpop.xlane.xlu0 %199
    %v201 = vsel %vm197, %v195, -inf
    %202 = vmax.xlane.f32.xlu0 %v201
    %v203 = vpop.xlane.xlu0 %202
    %v204 = vsub.f32 %v193, %v200
    %v205 = vsub.f32 %v195, %v203
    %v206 = vmul.f32 %v204, 1.442695
    %v207 = vpow.pop %v206
    %v208 = vmul.f32 %v205, 1.442695
    %v209 = vpow.pop %v208
    %v210 = vpack.c.bf16 %v209, %v207
    %v212 = vsel %vm197, %v210, 0
    %214 = vmatpush.bf16.msra.mxu0 0
    %215 = vmatpush.bf16.msra.mxu0 0
    %216 = vmatpush.bf16.msra.mxu0 0
    %217 = vmatpush.bf16.msra.mxu0 0
    %218 = vmatpush.bf16.msra.mxu0 %v179
    %219 = vmatpush.bf16.msra.mxu0 %v178
    %220 = vmatpush.bf16.msra.mxu0 %v177
    %221 = vmatpush.bf16.msra.mxu0 %v176
    %222 = vmatmul.bf16.gmra.mxu0 %v212
    %v223 = vpop.f32.mrf.mxu0
    %v224 = vadd.f32 0.0, %v223
    %v225 = vpop.f32.mrf.mxu0
    %v226 = vadd.f32 0.0, %v225
    %227 = vdwg.mxu0
    %v236 = vunpack.c.l.b16 %v140
    %v237 = vunpack.c.l.b16 %v141
    %v238 = vunpack.c.l.b16 %v142
    %v239 = vunpack.c.l.b16 %v143
    %v240 = vunpack.c.l.b16 %v144
    %v241 = vunpack.c.l.b16 %v145
    %v242 = vunpack.c.l.b16 %v146
    %v243 = vunpack.c.l.b16 %v147
    %v244 = vpack.c.b16 %v237, %v236
    %v245 = vpack.c.b16 %v239, %v238
    %v246 = vpack.c.b16 %v241, %v240
    %v247 = vpack.c.b16 %v243, %v242
    %252 = vmatpush.bf16.msra.mxu0 0
    %253 = vmatpush.bf16.msra.mxu0 0
    %254 = vmatpush.bf16.msra.mxu0 0
    %255 = vmatpush.bf16.msra.mxu0 0
    %256 = vmatpush.bf16.msra.mxu0 %v247
    %257 = vmatpush.bf16.msra.mxu0 %v246
    %258 = vmatpush.bf16.msra.mxu0 %v245
    %259 = vmatpush.bf16.msra.mxu0 %v244
    %260 = vmatmul.bf16.gmra.mxu0 %v212
    %v261 = vpop.f32.mrf.mxu0
    %v262 = vadd.f32 0.0, %v261
    %v263 = vpop.f32.mrf.mxu0
    %v264 = vadd.f32 0.0, %v263
    %265 = vdwg.mxu0
    %v266 = vrcp.pop %v262
    %v267 = vmul.f32 %v262, %v266
    %v268 = vsub.f32 1.0, %v267
    %v269 = vmul.f32 %v266, %v268
    %v270 = vadd.f32 %v266, %v269
    %vm271 = vweird.f32 %v262
    %vm272 = vweird.f32 %v266
    %vm273 = vmor %vm271, %vm272
    %v274 = vsel %vm273, %v266, %v270
    %v275 = vand.u32 2147483647, %v262
    %vm276 = vcmp.eq.f32.partialorder %v275, 8.507059e+37
    %v277 = vand.u32 %v262, 2147483648
    %v278 = vor.u32 1.1754944e-38, %v277
    %v279 = vsel %vm276, %v278, %v274
    %v280 = vmul.f32 %v224, %v279
    %v281 = vrcp.pop %v264
    %v282 = vmul.f32 %v264, %v281
    %v283 = vsub.f32 1.0, %v282
    %v284 = vmul.f32 %v281, %v283
    %v285 = vadd.f32 %v281, %v284
    %vm286 = vweird.f32 %v264
    %vm287 = vweird.f32 %v281
    %vm288 = vmor %vm286, %vm287
    %v289 = vsel %vm288, %v281, %v285
    %v290 = vand.u32 2147483647, %v264
    %vm291 = vcmp.eq.f32.partialorder %v290, 8.507059e+37
    %v292 = vand.u32 %v264, 2147483648
    %v293 = vor.u32 1.1754944e-38, %v292
    %v294 = vsel %vm291, %v293, %v289
    %v295 = vmul.f32 %v226, %v294
    %v296 = vpack.c.bf16 %v295, %v280
    %v297 = vld [vmem:[%s2] sm:$0xf]
    %v298 = vld [vmem:[%s2 + $0x4] sm:$0xf]
    %v299 = vld [vmem:[%s2 + $0x8] sm:$0xf]
    %v300 = vld [vmem:[%s2 + $0xc] sm:$0xf]
    %v301 = vld [vmem:[%s2 + $0x10] sm:$0xf]
    %v302 = vld [vmem:[%s2 + $0x14] sm:$0xf]
    %v303 = vld [vmem:[%s2 + $0x18] sm:$0xf]
    %v304 = vld [vmem:[%s2 + $0x1c] sm:$0xf]
    %v305 = vld [vmem:[%s2 + $0x20] sm:$0xf]
    %v306 = vld [vmem:[%s2 + $0x24] sm:$0xf]
    %v307 = vld [vmem:[%s2 + $0x28] sm:$0xf]
    %v308 = vld [vmem:[%s2 + $0x2c] sm:$0xf]
    %v309 = vld [vmem:[%s2 + $0x30] sm:$0xf]
    %v310 = vld [vmem:[%s2 + $0x34] sm:$0xf]
    %v311 = vld [vmem:[%s2 + $0x38] sm:$0xf]
    %v312 = vld [vmem:[%s2 + $0x3c] sm:$0xf]
    %v313 = vld [vmem:[%s3] sm:$0x1]
    %v315 = vperm.slane %v313, 0
    %v333 = vunpack.c.l.b16 %v297
    %v334 = vunpack.c.l.b16 %v298
    %v335 = vunpack.c.l.b16 %v299
    %v336 = vunpack.c.l.b16 %v300
    %v337 = vunpack.c.l.b16 %v301
    %v338 = vunpack.c.l.b16 %v302
    %v339 = vunpack.c.l.b16 %v303
    %v340 = vunpack.c.l.b16 %v304
    %v341 = vunpack.c.l.b16 %v305
    %v342 = vunpack.c.l.b16 %v306
    %v343 = vunpack.c.l.b16 %v307
    %v344 = vunpack.c.l.b16 %v308
    %v345 = vunpack.c.l.b16 %v309
    %v346 = vunpack.c.l.b16 %v310
    %v347 = vunpack.c.l.b16 %v311
    %v348 = vunpack.c.l.b16 %v312
    %v349 = vpack.c.b16 %v334, %v333
    %v350 = vpack.c.b16 %v336, %v335
    %v351 = vpack.c.b16 %v338, %v337
    %v352 = vpack.c.b16 %v340, %v339
    %v353 = vpack.c.b16 %v342, %v341
    %v354 = vpack.c.b16 %v344, %v343
    %v355 = vpack.c.b16 %v346, %v345
    %v356 = vpack.c.b16 %v348, %v347
    %365 = vmatpush.bf16.msra.mxu0 %v356
    %366 = vmatpush.bf16.msra.mxu0 %v355
    %367 = vmatpush.bf16.msra.mxu0 %v354
    %368 = vmatpush.bf16.msra.mxu0 %v353
    %369 = vmatpush.bf16.msra.mxu0 %v352
    %370 = vmatpush.bf16.msra.mxu0 %v351
    %371 = vmatpush.bf16.msra.mxu0 %v350
    %372 = vmatpush.bf16.msra.mxu0 %v349
    %373 = vmatmul.bf16.gmra.mxu0 %v296
    %v374 = vpop.f32.mrf.mxu0
    %v375 = vadd.f32 %v315, %v374
    %v376 = vpop.f32.mrf.mxu0
    %v377 = vadd.f32 %v315, %v376
    %378 = vdwg.mxu0
    %vm379 = vcmask 261120
    %380 = vst.msk [vmem:[#allocation2] sm:$0xff] %vm379, %v375
    %381 = vst.msk [vmem:[#allocation2 + $0x8] sm:$0xff] %vm379, %v377
    // Predicated region
    $region26: #{causal_self_attention.1} parent=1 // pred_check
      _
    $region27: #{causal_self_attention.1} parent=1 // pred_check_branch
      %383 = sbr.rel (0) target = $region29
    $region28: #{causal_self_attention.1} parent=1 // pred_region
      %385 = vsyncadd [#allocation3], 0
      %s386 = sshll.u32 [#allocation2], 4
      %s387 = int_to_ptr.vmem [resolvable:$true] %s386
      %s388 = sshll.u32 %s6, 4
      %s389 = int_to_ptr.hbm [resolvable:$true] %s388
      %394 = dma.vmem_to_hbm [thread:$0]  %s387, 256, %s389, [#allocation3], 128, 128, 8
    $region29: #{causal_self_attention.1} parent=1 // pred_fallthru
      _
    // Predicated region
    $region30: #{causal_self_attention.1} parent=1 // pred_check
      _
    $region31: #{causal_self_attention.1} parent=1 // pred_check_branch
      %396 = sbr.rel (0) target = $region33
    $region32: #{causal_self_attention.1} parent=1 // pred_region
      %398 = dma.done [#allocation3], 256
    $region33: #{causal_self_attention.1} parent=1 // pred_fallthru
      _
    %399 = vsyncpa [#allocation3], 1

</llo_original>
